<compile_context>
chip_gen: v5e
topology: v5e:2x2
jax: 0.10.0
libtpu: 0.0.40
codegen_flags: <defaults>
</compile_context>

<pallas_src>
import functools
import math

import jax
import jax.numpy as jnp
from jax.experimental import pallas as pl
from jax.experimental.pallas import tpu as pltpu


# ---------------------------------------------------------------------------
# Parameter fold (init-time, NOT per forward call)
# ---------------------------------------------------------------------------
def prepare_mylinear_params(weight, bias):
    """One-time fold of PyTorch-layout parameters into kernel layout.

    weight: (nums, C, M, O) f32, bias: (nums, C, O) f32
    Returns:
      w_c  : (nums, M, C*O) bf16  -- compact per-position matmul weight
      b_row: (1, nums*C*O)  f32   -- flattened bias (added after f32 accum)
    """
    nums, C, M, O = weight.shape
    CO = C * O
    w_c = jnp.transpose(weight, (0, 2, 1, 3)).reshape(nums, M, CO)
    w_c = w_c.astype(jnp.bfloat16)          # halves the dominant HBM traffic
    b_row = bias.reshape(1, nums * CO)      # keep bias in f32
    return w_c, b_row


# ---------------------------------------------------------------------------
# Kernel
# ---------------------------------------------------------------------------
def _mylinear_kernel(x_ref, w_ref, b_ref, o_ref, *, nb, co):
    # x_ref: (bs, nb, M)    f32
    # w_ref: (nb, M, co)    bf16
    # b_ref: (1, nb*co)     f32
    # o_ref: (bs, nb*co)    f32  (lane-dense: nb*co is a multiple of 128 or full)
    xb = x_ref[...].astype(jnp.bfloat16)     # cast activations once, in-kernel
    # Static unroll over the (small, <= 32) per-block positions; each step is a
    # tiny bf16xbf16->f32 MXU push, accumulated in f32 by the MXU.
    for n in range(nb):
        zn = jnp.dot(xb[:, n, :], w_ref[n],
                     preferred_element_type=jnp.float32)      # (bs, co) f32
        lo = n * co
        o_ref[:, lo:lo + co] = (zn + b_ref[:, lo:lo + co]).astype(o_ref.dtype)


# ---------------------------------------------------------------------------
# Wrapper
# ---------------------------------------------------------------------------
def _choose_positions_per_block(nums, CO, max_unroll=32):
    """Smallest NB with NB*CO % 128 == 0 (lane-dense output block) and NB a
    multiple of 8 (sublane-friendly x block), grown while it still divides
    `nums` and the in-kernel unroll stays small.  Falls back to NB = nums
    (block == full array dims, always legal)."""
    base = 128 // math.gcd(CO, 128)
    base = ((base + 7) // 8) * 8
    if nums % base != 0:
        return nums
    nb = base
    while nb * 2 <= max_unroll and nums % (nb * 2) == 0:
        nb *= 2
    return nb


def _conservative_vmem_budget_bytes():
    # Physical VMEM: 128 MiB (v5e/v6e), 64 MiB (v7x); default *scoped* VMEM is
    # 16-32 MiB.  Use a quarter of the reported physical capacity as a
    # conservative budget; fall back to 16 MiB if the query is unavailable.
    try:
        return int(pltpu.get_tpu_info().vmem_capacity_bytes) // 4
    except Exception:  # pragma: no cover - e.g. interpret mode / old jax
        return 16 * 1024 * 1024


def my_linear(x, w_c, b_row, nums, num_classes, out_features):
    """x: (bs, nums, M) f32; w_c/b_row from prepare_mylinear_params.

    Returns (bs, nums, num_classes, out_features), matching
    torch.einsum('bnm,ncmo->bnco', x, W) + b  (weights in bf16, f32 accum).
    """
    bs, nums_x, M = x.shape
    assert nums_x == nums
    CO = num_classes * out_features
    assert w_c.shape == (nums, M, CO)
    assert b_row.shape == (1, nums * CO)

    NB = _choose_positions_per_block(nums, CO)
    grid = (nums // NB,)

    # --- VMEM guard (double-buffered per-step footprint vs. scoped budget) ---
    x_blk = bs * NB * M * x.dtype.itemsize
    w_blk = NB * M * CO * w_c.dtype.itemsize
    b_blk = NB * CO * b_row.dtype.itemsize
    o_blk = bs * NB * CO * x.dtype.itemsize
    footprint = 2 * (x_blk + w_blk + b_blk + o_blk)   # pipeline double-buffers
    budget = _conservative_vmem_budget_bytes()
    assert footprint <= budget, (
        f"per-step VMEM footprint {footprint} B exceeds conservative budget "
        f"{budget} B; shrink NB / add a batch grid axis")

    kernel = functools.partial(_mylinear_kernel, nb=NB, co=CO)

    out = pl.pallas_call(
        kernel,
        out_shape=jax.ShapeDtypeStruct((bs, nums * CO), x.dtype),
        grid=grid,
        in_specs=[
            pl.BlockSpec((bs, NB, M), lambda i: (0, i, 0)),    # x (f32)
            pl.BlockSpec((NB, M, CO), lambda i: (i, 0, 0)),    # w (bf16)
            pl.BlockSpec((1, NB * CO), lambda i: (0, i)),      # bias (f32)
        ],
        out_specs=pl.BlockSpec((bs, NB * CO), lambda i: (0, i)),
        compiler_params=pltpu.CompilerParams(
            dimension_semantics=("parallel",)),                # v7x 2-TC shard
        cost_estimate=pl.CostEstimate(
            flops=2 * bs * nums * M * CO,
            transcendentals=0,
            bytes_accessed=(bs * nums * M * 4      # x  f32
                            + nums * M * CO * 2    # w  bf16
                            + nums * CO * 4        # b  f32
                            + bs * nums * CO * 4)  # out f32
        ),
    )(x, w_c, b_row)

    # No padded columns to strip: contiguous (free) reshape only.
    return out.reshape(bs, nums, num_classes, out_features)


# ---------------------------------------------------------------------------
# Demo / self-check
# ---------------------------------------------------------------------------
if __name__ == "__main__":
    # Small shapes consistent with the module's forward signature.
    bs, nums, num_classes, in_features, out_features = 2, 8, 10, 16, 8

    key = jax.random.PRNGKey(0)
    kx, kw, kb = jax.random.split(key, 3)

    # Deterministic init mirroring reset_parameters():
    # stdv = 1/sqrt(weight.size(1)) = 1/sqrt(num_classes), uniform(-stdv, stdv)
    stdv = 1.0 / math.sqrt(num_classes)
    x = jax.random.normal(kx, (bs, nums, in_features), dtype=jnp.float32)
    weight = jax.random.uniform(
        kw, (nums, num_classes, in_features, out_features),
        dtype=jnp.float32, minval=-stdv, maxval=stdv)
    bias = jax.random.uniform(
        kb, (nums, num_classes, out_features),
        dtype=jnp.float32, minval=-stdv, maxval=stdv)

    # Parameter fold happens ONCE (module-init time), not per forward call.
    w_c, b_row = jax.block_until_ready(prepare_mylinear_params(weight, bias))

    out = jax.block_until_ready(
        my_linear(x, w_c, b_row, nums, num_classes, out_features))
    assert out.shape == (bs, nums, num_classes, out_features)

    # Reference 1: matched precision (inputs rounded to bf16, f32 accumulate) —
    # should agree to f32 accumulation-order noise.
    x_bf = x.astype(jnp.bfloat16).astype(jnp.float32)
    w_bf = weight.astype(jnp.bfloat16).astype(jnp.float32)
    ref_bf = jnp.einsum('bnm,ncmo->bnco', x_bf, w_bf) + bias
    assert jnp.allclose(out, ref_bf, atol=1e-4, rtol=1e-4)

    # Reference 2: exact f32 forward — only bf16 rounding error should remain.
    ref_f32 = jnp.einsum('bnm,ncmo->bnco', x, weight) + bias
    assert jnp.allclose(out, ref_f32, atol=5e-2, rtol=5e-2)

    print("KERNEL_OK")
</pallas_src>

<mosaic_0001>
module attributes {stable_mosaic.version = 11 : i64} {
  func.func @_mylinear_kernel(%arg0: i32, %arg1: memref<2x8x16xf32, #tpu.memory_space<vmem>>, %arg2: memref<8x16x80xbf16, #tpu.memory_space<vmem>>, %arg3: memref<1x640xf32, #tpu.memory_space<vmem>>, %arg4: memref<2x640xf32, #tpu.memory_space<vmem>>) attributes {dimension_semantics = [#tpu.dimension_semantics<parallel>], iteration_bounds = array<i64: 1>, scalar_prefetch = 0 : i64, scratch_operands = 0 : i64, tpu.core_type = #tpu.core_type<tc>, window_params = [{transform_indices = @transform_0, window_bounds = array<i64: 2, 8, 16>}, {transform_indices = @transform_1, window_bounds = array<i64: 8, 16, 80>}, {transform_indices = @transform_2, window_bounds = array<i64: 1, 640>}, {transform_indices = @transform_3, window_bounds = array<i64: 2, 640>}]} {
    %c0 = arith.constant 0 : index
    %c0_0 = arith.constant 0 : index
    %c0_1 = arith.constant 0 : index
    %0 = vector.load %arg1[%c0, %c0_0, %c0_1] : memref<2x8x16xf32, #tpu.memory_space<vmem>>, vector<2x8x16xf32>
    %1 = arith.truncf %0 : vector<2x8x16xf32> to vector<2x8x16xbf16>
    %2 = vector.extract_strided_slice %1 {offsets = [0, 0, 0], sizes = [2, 1, 16], strides = [1, 1, 1]} : vector<2x8x16xbf16> to vector<2x1x16xbf16>
    %3 = vector.shape_cast %2 : vector<2x1x16xbf16> to vector<2x16xbf16>
    %c0_2 = arith.constant 0 : index
    %c0_3 = arith.constant 0 : index
    %c0_4 = arith.constant 0 : index
    %4 = vector.load %arg2[%c0_2, %c0_3, %c0_4] : memref<8x16x80xbf16, #tpu.memory_space<vmem>>, vector<1x16x80xbf16>
    %5 = vector.shape_cast %4 : vector<1x16x80xbf16> to vector<16x80xbf16>
    %cst = arith.constant dense<0.000000e+00> : vector<2x80xf32>
    %6 = tpu.matmul %3, %5, %cst {dimension_numbers = #tpu.dot_dimension_numbers<[1], [0], [0], [1], [0, 0, 1, 1], [], []>} : vector<2x16xbf16>, vector<16x80xbf16>, vector<2x80xf32> -> vector<2x80xf32>
    %c0_5 = arith.constant 0 : index
    %c0_6 = arith.constant 0 : index
    %7 = vector.load %arg3[%c0_5, %c0_6] : memref<1x640xf32, #tpu.memory_space<vmem>>, vector<1x80xf32>
    %8 = vector.broadcast %7 : vector<1x80xf32> to vector<2x80xf32>
    %9 = arith.addf %6, %8 : vector<2x80xf32>
    %c0_7 = arith.constant 0 : index
    %c0_8 = arith.constant 0 : index
    %10 = vector.load %arg4[%c0_7, %c0_8] : memref<2x640xf32, #tpu.memory_space<vmem>>, vector<2x80xf32>
    tpu.vector_store %arg4[%c0_7, %c0_8], %9 {strides = array<i32>} : memref<2x640xf32, #tpu.memory_space<vmem>>, vector<2x80xf32>,
    %11 = vector.extract_strided_slice %1 {offsets = [0, 1, 0], sizes = [2, 1, 16], strides = [1, 1, 1]} : vector<2x8x16xbf16> to vector<2x1x16xbf16>
    %12 = vector.shape_cast %11 : vector<2x1x16xbf16> to vector<2x16xbf16>
    %c1 = arith.constant 1 : index
    %c0_9 = arith.constant 0 : index
    %c0_10 = arith.constant 0 : index
    %13 = vector.load %arg2[%c1, %c0_9, %c0_10] : memref<8x16x80xbf16, #tpu.memory_space<vmem>>, vector<1x16x80xbf16>
    %14 = vector.shape_cast %13 : vector<1x16x80xbf16> to vector<16x80xbf16>
    %cst_11 = arith.constant dense<0.000000e+00> : vector<2x80xf32>
    %15 = tpu.matmul %12, %14, %cst_11 {dimension_numbers = #tpu.dot_dimension_numbers<[1], [0], [0], [1], [0, 0, 1, 1], [], []>} : vector<2x16xbf16>, vector<16x80xbf16>, vector<2x80xf32> -> vector<2x80xf32>
    %c0_12 = arith.constant 0 : index
    %c80 = arith.constant 80 : index
    %16 = vector.load %arg3[%c0_12, %c80] : memref<1x640xf32, #tpu.memory_space<vmem>>, vector<1x80xf32>
    %17 = vector.broadcast %16 : vector<1x80xf32> to vector<2x80xf32>
    %18 = arith.addf %15, %17 : vector<2x80xf32>
    %c0_13 = arith.constant 0 : index
    %c80_14 = arith.constant 80 : index
    %19 = vector.load %arg4[%c0_13, %c80_14] : memref<2x640xf32, #tpu.memory_space<vmem>>, vector<2x80xf32>
    tpu.vector_store %arg4[%c0_13, %c80_14], %18 {strides = array<i32>} : memref<2x640xf32, #tpu.memory_space<vmem>>, vector<2x80xf32>,
    %20 = vector.extract_strided_slice %1 {offsets = [0, 2, 0], sizes = [2, 1, 16], strides = [1, 1, 1]} : vector<2x8x16xbf16> to vector<2x1x16xbf16>
    %21 = vector.shape_cast %20 : vector<2x1x16xbf16> to vector<2x16xbf16>
    %c2 = arith.constant 2 : index
    %c0_15 = arith.constant 0 : index
    %c0_16 = arith.constant 0 : index
    %22 = vector.load %arg2[%c2, %c0_15, %c0_16] : memref<8x16x80xbf16, #tpu.memory_space<vmem>>, vector<1x16x80xbf16>
    %23 = vector.shape_cast %22 : vector<1x16x80xbf16> to vector<16x80xbf16>
    %cst_17 = arith.constant dense<0.000000e+00> : vector<2x80xf32>
    %24 = tpu.matmul %21, %23, %cst_17 {dimension_numbers = #tpu.dot_dimension_numbers<[1], [0], [0], [1], [0, 0, 1, 1], [], []>} : vector<2x16xbf16>, vector<16x80xbf16>, vector<2x80xf32> -> vector<2x80xf32>
    %c0_18 = arith.constant 0 : index
    %c160 = arith.constant 160 : index
    %25 = vector.load %arg3[%c0_18, %c160] : memref<1x640xf32, #tpu.memory_space<vmem>>, vector<1x80xf32>
    %26 = vector.broadcast %25 : vector<1x80xf32> to vector<2x80xf32>
    %27 = arith.addf %24, %26 : vector<2x80xf32>
    %c0_19 = arith.constant 0 : index
    %c160_20 = arith.constant 160 : index
    %28 = vector.load %arg4[%c0_19, %c160_20] : memref<2x640xf32, #tpu.memory_space<vmem>>, vector<2x80xf32>
    tpu.vector_store %arg4[%c0_19, %c160_20], %27 {strides = array<i32>} : memref<2x640xf32, #tpu.memory_space<vmem>>, vector<2x80xf32>,
    %29 = vector.extract_strided_slice %1 {offsets = [0, 3, 0], sizes = [2, 1, 16], strides = [1, 1, 1]} : vector<2x8x16xbf16> to vector<2x1x16xbf16>
    %30 = vector.shape_cast %29 : vector<2x1x16xbf16> to vector<2x16xbf16>
    %c3 = arith.constant 3 : index
    %c0_21 = arith.constant 0 : index
    %c0_22 = arith.constant 0 : index
    %31 = vector.load %arg2[%c3, %c0_21, %c0_22] : memref<8x16x80xbf16, #tpu.memory_space<vmem>>, vector<1x16x80xbf16>
    %32 = vector.shape_cast %31 : vector<1x16x80xbf16> to vector<16x80xbf16>
    %cst_23 = arith.constant dense<0.000000e+00> : vector<2x80xf32>
    %33 = tpu.matmul %30, %32, %cst_23 {dimension_numbers = #tpu.dot_dimension_numbers<[1], [0], [0], [1], [0, 0, 1, 1], [], []>} : vector<2x16xbf16>, vector<16x80xbf16>, vector<2x80xf32> -> vector<2x80xf32>
    %c0_24 = arith.constant 0 : index
    %c240 = arith.constant 240 : index
    %34 = vector.load %arg3[%c0_24, %c240] : memref<1x640xf32, #tpu.memory_space<vmem>>, vector<1x80xf32>
    %35 = vector.broadcast %34 : vector<1x80xf32> to vector<2x80xf32>
    %36 = arith.addf %33, %35 : vector<2x80xf32>
    %c0_25 = arith.constant 0 : index
    %c240_26 = arith.constant 240 : index
    %37 = vector.load %arg4[%c0_25, %c240_26] : memref<2x640xf32, #tpu.memory_space<vmem>>, vector<2x80xf32>
    tpu.vector_store %arg4[%c0_25, %c240_26], %36 {strides = array<i32>} : memref<2x640xf32, #tpu.memory_space<vmem>>, vector<2x80xf32>,
    %38 = vector.extract_strided_slice %1 {offsets = [0, 4, 0], sizes = [2, 1, 16], strides = [1, 1, 1]} : vector<2x8x16xbf16> to vector<2x1x16xbf16>
    %39 = vector.shape_cast %38 : vector<2x1x16xbf16> to vector<2x16xbf16>
    %c4 = arith.constant 4 : index
    %c0_27 = arith.constant 0 : index
    %c0_28 = arith.constant 0 : index
    %40 = vector.load %arg2[%c4, %c0_27, %c0_28] : memref<8x16x80xbf16, #tpu.memory_space<vmem>>, vector<1x16x80xbf16>
    %41 = vector.shape_cast %40 : vector<1x16x80xbf16> to vector<16x80xbf16>
    %cst_29 = arith.constant dense<0.000000e+00> : vector<2x80xf32>
    %42 = tpu.matmul %39, %41, %cst_29 {dimension_numbers = #tpu.dot_dimension_numbers<[1], [0], [0], [1], [0, 0, 1, 1], [], []>} : vector<2x16xbf16>, vector<16x80xbf16>, vector<2x80xf32> -> vector<2x80xf32>
    %c0_30 = arith.constant 0 : index
    %c320 = arith.constant 320 : index
    %43 = vector.load %arg3[%c0_30, %c320] : memref<1x640xf32, #tpu.memory_space<vmem>>, vector<1x80xf32>
    %44 = vector.broadcast %43 : vector<1x80xf32> to vector<2x80xf32>
    %45 = arith.addf %42, %44 : vector<2x80xf32>
    %c0_31 = arith.constant 0 : index
    %c320_32 = arith.constant 320 : index
    %46 = vector.load %arg4[%c0_31, %c320_32] : memref<2x640xf32, #tpu.memory_space<vmem>>, vector<2x80xf32>
    tpu.vector_store %arg4[%c0_31, %c320_32], %45 {strides = array<i32>} : memref<2x640xf32, #tpu.memory_space<vmem>>, vector<2x80xf32>,
    %47 = vector.extract_strided_slice %1 {offsets = [0, 5, 0], sizes = [2, 1, 16], strides = [1, 1, 1]} : vector<2x8x16xbf16> to vector<2x1x16xbf16>
    %48 = vector.shape_cast %47 : vector<2x1x16xbf16> to vector<2x16xbf16>
    %c5 = arith.constant 5 : index
    %c0_33 = arith.constant 0 : index
    %c0_34 = arith.constant 0 : index
    %49 = vector.load %arg2[%c5, %c0_33, %c0_34] : memref<8x16x80xbf16, #tpu.memory_space<vmem>>, vector<1x16x80xbf16>
    %50 = vector.shape_cast %49 : vector<1x16x80xbf16> to vector<16x80xbf16>
    %cst_35 = arith.constant dense<0.000000e+00> : vector<2x80xf32>
    %51 = tpu.matmul %48, %50, %cst_35 {dimension_numbers = #tpu.dot_dimension_numbers<[1], [0], [0], [1], [0, 0, 1, 1], [], []>} : vector<2x16xbf16>, vector<16x80xbf16>, vector<2x80xf32> -> vector<2x80xf32>
    %c0_36 = arith.constant 0 : index
    %c400 = arith.constant 400 : index
    %52 = vector.load %arg3[%c0_36, %c400] : memref<1x640xf32, #tpu.memory_space<vmem>>, vector<1x80xf32>
    %53 = vector.broadcast %52 : vector<1x80xf32> to vector<2x80xf32>
    %54 = arith.addf %51, %53 : vector<2x80xf32>
    %c0_37 = arith.constant 0 : index
    %c400_38 = arith.constant 400 : index
    %55 = vector.load %arg4[%c0_37, %c400_38] : memref<2x640xf32, #tpu.memory_space<vmem>>, vector<2x80xf32>
    tpu.vector_store %arg4[%c0_37, %c400_38], %54 {strides = array<i32>} : memref<2x640xf32, #tpu.memory_space<vmem>>, vector<2x80xf32>,
    %56 = vector.extract_strided_slice %1 {offsets = [0, 6, 0], sizes = [2, 1, 16], strides = [1, 1, 1]} : vector<2x8x16xbf16> to vector<2x1x16xbf16>
    %57 = vector.shape_cast %56 : vector<2x1x16xbf16> to vector<2x16xbf16>
    %c6 = arith.constant 6 : index
    %c0_39 = arith.constant 0 : index
    %c0_40 = arith.constant 0 : index
    %58 = vector.load %arg2[%c6, %c0_39, %c0_40] : memref<8x16x80xbf16, #tpu.memory_space<vmem>>, vector<1x16x80xbf16>
    %59 = vector.shape_cast %58 : vector<1x16x80xbf16> to vector<16x80xbf16>
    %cst_41 = arith.constant dense<0.000000e+00> : vector<2x80xf32>
    %60 = tpu.matmul %57, %59, %cst_41 {dimension_numbers = #tpu.dot_dimension_numbers<[1], [0], [0], [1], [0, 0, 1, 1], [], []>} : vector<2x16xbf16>, vector<16x80xbf16>, vector<2x80xf32> -> vector<2x80xf32>
    %c0_42 = arith.constant 0 : index
    %c480 = arith.constant 480 : index
    %61 = vector.load %arg3[%c0_42, %c480] : memref<1x640xf32, #tpu.memory_space<vmem>>, vector<1x80xf32>
    %62 = vector.broadcast %61 : vector<1x80xf32> to vector<2x80xf32>
    %63 = arith.addf %60, %62 : vector<2x80xf32>
    %c0_43 = arith.constant 0 : index
    %c480_44 = arith.constant 480 : index
    %64 = vector.load %arg4[%c0_43, %c480_44] : memref<2x640xf32, #tpu.memory_space<vmem>>, vector<2x80xf32>
    tpu.vector_store %arg4[%c0_43, %c480_44], %63 {strides = array<i32>} : memref<2x640xf32, #tpu.memory_space<vmem>>, vector<2x80xf32>,
    %65 = vector.extract_strided_slice %1 {offsets = [0, 7, 0], sizes = [2, 1, 16], strides = [1, 1, 1]} : vector<2x8x16xbf16> to vector<2x1x16xbf16>
    %66 = vector.shape_cast %65 : vector<2x1x16xbf16> to vector<2x16xbf16>
    %c7 = arith.constant 7 : index
    %c0_45 = arith.constant 0 : index
    %c0_46 = arith.constant 0 : index
    %67 = vector.load %arg2[%c7, %c0_45, %c0_46] : memref<8x16x80xbf16, #tpu.memory_space<vmem>>, vector<1x16x80xbf16>
    %68 = vector.shape_cast %67 : vector<1x16x80xbf16> to vector<16x80xbf16>
    %cst_47 = arith.constant dense<0.000000e+00> : vector<2x80xf32>
    %69 = tpu.matmul %66, %68, %cst_47 {dimension_numbers = #tpu.dot_dimension_numbers<[1], [0], [0], [1], [0, 0, 1, 1], [], []>} : vector<2x16xbf16>, vector<16x80xbf16>, vector<2x80xf32> -> vector<2x80xf32>
    %c0_48 = arith.constant 0 : index
    %c560 = arith.constant 560 : index
    %70 = vector.load %arg3[%c0_48, %c560] : memref<1x640xf32, #tpu.memory_space<vmem>>, vector<1x80xf32>
    %71 = vector.broadcast %70 : vector<1x80xf32> to vector<2x80xf32>
    %72 = arith.addf %69, %71 : vector<2x80xf32>
    %c0_49 = arith.constant 0 : index
    %c560_50 = arith.constant 560 : index
    %73 = vector.load %arg4[%c0_49, %c560_50] : memref<2x640xf32, #tpu.memory_space<vmem>>, vector<2x80xf32>
    tpu.vector_store %arg4[%c0_49, %c560_50], %72 {strides = array<i32>} : memref<2x640xf32, #tpu.memory_space<vmem>>, vector<2x80xf32>,
    return
  }
  func.func @transform_0(%arg0: i32) -> (i32, i32, i32) {
    %c0_i32 = arith.constant 0 : i32
    %c0_i32_0 = arith.constant 0 : i32
    %c0_i32_1 = arith.constant 0 : i32
    return %c0_i32, %arg0, %c0_i32_0 : i32, i32, i32
  }
  func.func @transform_1(%arg0: i32) -> (i32, i32, i32) {
    %c0_i32 = arith.constant 0 : i32
    %c0_i32_0 = arith.constant 0 : i32
    %c0_i32_1 = arith.constant 0 : i32
    return %arg0, %c0_i32, %c0_i32_0 : i32, i32, i32
  }
  func.func @transform_2(%arg0: i32) -> (i32, i32) {
    %c0_i32 = arith.constant 0 : i32
    %c0_i32_0 = arith.constant 0 : i32
    return %c0_i32, %arg0 : i32, i32
  }
  func.func @transform_3(%arg0: i32) -> (i32, i32) {
    %c0_i32 = arith.constant 0 : i32
    %c0_i32_0 = arith.constant 0 : i32
    return %c0_i32, %arg0 : i32, i32
  }
}

</mosaic_0001>

<llo_original>
// kernel: tpu_custom_call.1
$region0: #{tpu_custom_call.1}
  #allocation0 [shape = 'u32[]', space=smem, size = 0x4, offset = 0x4, fixed_abs, tag = 'smem constant byte address 0x4 - core index']
  #allocation1 [shape = 'u32[72,128]{1,0:T(1,128)}', space=vmem, size = 0x9000, scoped, tag = 'internal scratch']
  %s0 = inlined_call_operand.hbm [shape: f32[2,8,16], index: 0, kind: input, shape index: {}]
  %s1 = inlined_call_operand.hbm [shape: bf16[8,16,80], index: 1, kind: input, shape index: {}]
  %s2 = inlined_call_operand.hbm [shape: f32[1,640], index: 2, kind: input, shape index: {}]
  %s3 = inlined_call_operand.hbm [shape: f32[2,640], index: 3, kind: output, shape index: {}]
  %s4 = sld [smem:[#allocation0]]
  $region34: #{tpu_custom_call.1} parent=0
    _
  %s6 = ssub.s32 1, %s4
  %s7 = scalar_select 0, %s6, %s4
  $region1: #{tpu_custom_call.1} parent=0
    #allocation2 [shape = 'u8[8192]{0}', space=vmem, size = 0x2000, scoped, tag = 'input window, operand 0, single buffered']
    #allocation3 [shape = 's32[1]{0}', space=sflag, size = 0x4, scoped, tag = 'scoped memory for tpu_custom_call.1']
    #allocation4 [shape = 's32[1]{0}', space=sflag, size = 0x4, scoped, tag = 'scoped memory for tpu_custom_call.1']
    #allocation5 [shape = 'u8[32768]{0}', space=vmem, size = 0x8000, scoped, tag = 'input window, operand 1, single buffered']
    #allocation6 [shape = 's32[1]{0}', space=sflag, size = 0x4, scoped, tag = 'scoped memory for tpu_custom_call.1']
    #allocation7 [shape = 'u8[2560]{0}', space=vmem, size = 0xc00, scoped, tag = 'input window, operand 2, single buffered']
    #allocation8 [shape = 'u8[5120]{0}', space=vmem, size = 0x1400, scoped, tag = 'output window, operand 0, single buffered']
    %8 = vsyncpa [#allocation3], 0
    %9 = vsyncpa [#allocation6], 0
    %10 = vsyncpa [#allocation4], 0
    // Predicated region
    $region2: #{tpu_custom_call.1} parent=1 // pred_check
      _
    $region3: #{tpu_custom_call.1} parent=1 // pred_check_branch
      %12 = sbr.rel (0) target = $region5
    $region4: #{tpu_custom_call.1} parent=1 // pred_region
      %14 = vsyncadd [#allocation3], 0
      %s15 = sshll.u32 %s0, 4
      %s16 = int_to_ptr.hbm [resolvable:$true] %s15
      %s17 = sshll.u32 [#allocation2], 4
      %s18 = int_to_ptr.vmem [resolvable:$true] %s17
      %23 = dma.hbm_to_vmem [thread:$0]  %s16, 256, %s18, [#allocation3], 128, 128, 8
    $region5: #{tpu_custom_call.1} parent=1 // pred_fallthru
      _
    // Predicated region
    $region6: #{tpu_custom_call.1} parent=1 // pred_check
      _
    $region7: #{tpu_custom_call.1} parent=1 // pred_check_branch
      %25 = sbr.rel (0) target = $region9
    $region8: #{tpu_custom_call.1} parent=1 // pred_region
      %27 = vsyncadd [#allocation6], 0
      %s28 = sshll.u32 %s1, 4
      %s29 = int_to_ptr.hbm [resolvable:$true] %s28
      %s30 = sshll.u32 [#allocation5], 4
      %s31 = int_to_ptr.vmem [resolvable:$true] %s30
      %36 = dma.hbm_to_vmem [thread:$0]  %s29, 1024, %s31, [#allocation6], 64, 64, 4
    $region9: #{tpu_custom_call.1} parent=1 // pred_fallthru
      _
    // Predicated region
    $region10: #{tpu_custom_call.1} parent=1 // pred_check
      _
    $region11: #{tpu_custom_call.1} parent=1 // pred_check_branch
      %38 = sbr.rel (0) target = $region13
    $region12: #{tpu_custom_call.1} parent=1 // pred_region
      %40 = vsyncadd [#allocation6], 0
      %s42 = sshll.u32 %s2, 4
      %s43 = int_to_ptr.hbm [resolvable:$true] %s42
      %s44 = sshll.u32 [#allocation7], 4
      %s45 = int_to_ptr.vmem [resolvable:$true] %s44
      %47 = dma.hbm_to_vmem [thread:$0]  %s43, 80, %s45, [#allocation6]
    $region13: #{tpu_custom_call.1} parent=1 // pred_fallthru
      _
    // Predicated region
    $region14: #{tpu_custom_call.1} parent=1 // pred_check
      _
    $region15: #{tpu_custom_call.1} parent=1 // pred_check_branch
      %49 = sbr.rel (0) target = $region17
    $region16: #{tpu_custom_call.1} parent=1 // pred_region
      %51 = dma.done [#allocation3], 256
    $region17: #{tpu_custom_call.1} parent=1 // pred_fallthru
      _
    // Predicated region
    $region18: #{tpu_custom_call.1} parent=1 // pred_check
      _
    $region19: #{tpu_custom_call.1} parent=1 // pred_check_branch
      %53 = sbr.rel (0) target = $region21
    $region20: #{tpu_custom_call.1} parent=1 // pred_region
      %55 = dma.done [#allocation6], 1024
    $region21: #{tpu_custom_call.1} parent=1 // pred_fallthru
      _
    // Predicated region
    $region22: #{tpu_custom_call.1} parent=1 // pred_check
      _
    $region23: #{tpu_custom_call.1} parent=1 // pred_check_branch
      %57 = sbr.rel (0) target = $region25
    $region24: #{tpu_custom_call.1} parent=1 // pred_region
      %59 = dma.done [#allocation6], 80
    $region25: #{tpu_custom_call.1} parent=1 // pred_fallthru
      _
    %v61 = vld [vmem:[#allocation2] sm:$0xff]
    %v62 = vld [vmem:[#allocation2 + $0x8] sm:$0xff]
    %v63 = vpack.c.bf16 %v61, %v61
    %v64 = vpack.c.bf16 %v62, %v62
    %v65 = vld [vmem:[#allocation5] sm:$0xf]
    %v66 = vld [vmem:[#allocation5 + $0x4] sm:$0xf]
    %v67 = vld [vmem:[#allocation7] sm:$0x1]
    %v69 = vperm.slane %v67, 0
    %v73 = vunpack.c.l.b16 %v63
    %v74 = vunpack.c.l.b16 %v64
    %v75 = vpack.c.b16 %v73, %v73
    %v76 = vpack.c.b16 %v74, %v74
    %v77 = vunpack.c.l.b16 %v75
    %v78 = vunpack.c.l.b16 %v76
    %v79 = vrot.slane %v78, 7
    %vm80 = vcmask 1041409
    %v81 = vsel %vm80, %v79, %v77
    %v82 = vpack.c.b16 %v81, %v81
    %v85 = vunpack.c.l.b16 %v65
    %v86 = vunpack.c.l.b16 %v66
    %v87 = vpack.c.b16 %v86, %v85
    %vm89 = vcmask 130048
    %v91 = vsel %vm89, %v82, 0
    %93 = vmatpush.bf16.msra.mxu0 0
    %94 = vmatpush.bf16.msra.mxu0 0
    %95 = vmatpush.bf16.msra.mxu0 0
    %96 = vmatpush.bf16.msra.mxu0 0
    %97 = vmatpush.bf16.msra.mxu0 0
    %98 = vmatpush.bf16.msra.mxu0 0
    %99 = vmatpush.bf16.msra.mxu0 0
    %100 = vmatpush.bf16.msra.mxu0 %v87
    %101 = vmatmul.bf16.gmra.mxu0 %v91
    %v102 = vpop.f32.mrf.mxu0
    %v103 = vadd.f32 %v69, %v102
    %v104 = vpop.f32.mrf.mxu0
    %105 = vdwg.mxu0
    %vm106 = vcmask 648192
    %107 = vst.msk [vmem:[#allocation8] sm:$0x3] %vm106, %v103
    %s108 = scalar_lea.vmem [#allocation5], 8
    %v109 = vld [vmem:[%s108] sm:$0xf]
    %v110 = vld [vmem:[%s108 + $0x4] sm:$0xf]
    %v111 = vld [vmem:[#allocation7] sm:$0x3]
    %v113 = vperm.slane %v111, 0
    %v114 = vperm.slane %v111, 1
    %v115 = vrot.slane %v77, 1
    %v116 = vsel %vm80, %v78, %v115
    %v117 = vpack.c.b16 %v116, %v116
    %v120 = vunpack.c.l.b16 %v109
    %v121 = vunpack.c.l.b16 %v110
    %v122 = vpack.c.b16 %v121, %v120
    %124 = vrot.lane.b32.xlu0 %v113, 48
    %v125 = vpop.permute.xlu0 %124
    %126 = vrot.lane.b32.xlu0 %v114, 48
    %v127 = vpop.permute.xlu0 %126
    %vm128 = vcmask 392192
    %v129 = vsel %vm128, %v125, %v127
    %v132 = vsel %vm89, %v117, 0
    %134 = vmatpush.bf16.msra.mxu0 0
    %135 = vmatpush.bf16.msra.mxu0 0
    %136 = vmatpush.bf16.msra.mxu0 0
    %137 = vmatpush.bf16.msra.mxu0 0
    %138 = vmatpush.bf16.msra.mxu0 0
    %139 = vmatpush.bf16.msra.mxu0 0
    %140 = vmatpush.bf16.msra.mxu0 0
    %141 = vmatpush.bf16.msra.mxu0 %v122
    %142 = vmatmul.bf16.gmra.mxu0 %v132
    %v143 = vpop.f32.mrf.mxu0
    %v144 = vadd.f32 %v129, %v143
    %v145 = vpop.f32.mrf.mxu0
    %146 = vdwg.mxu0
    %148 = vrot.lane.b32.xlu0 %v144, 80
    %v149 = vpop.permute.xlu0 %148
    %v150 = vrot.slane %v149, 6
    %vm151 = vcmask 654336
    %v152 = vsel %vm151, %v150, %v149
    %vm154 = vcmask 1042048
    %vm155 = vcmask 257026
    %vm156 = vmor %vm155, %vm154
    %157 = vst.msk [vmem:[#allocation8] sm:$0xf] %vm156, %v152
    %s158 = scalar_lea.vmem [#allocation5], 16
    %v159 = vld [vmem:[%s158] sm:$0xf]
    %v160 = vld [vmem:[%s158 + $0x4] sm:$0xf]
    %v161 = vld [vmem:[#allocation7 + $0x1] sm:$0x1]
    %v163 = vperm.slane %v161, 0
    %v164 = vrot.slane %v77, 2
    %v165 = vrot.slane %v78, 1
    %v166 = vsel %vm80, %v165, %v164
    %v167 = vpack.c.b16 %v166, %v166
    %v170 = vunpack.c.l.b16 %v159
    %v171 = vunpack.c.l.b16 %v160
    %v172 = vpack.c.b16 %v171, %v170
    %174 = vrot.lane.b32.xlu0 %v163, 96
    %v175 = vpop.permute.xlu0 %174
    %v178 = vsel %vm89, %v167, 0
    %180 = vmatpush.bf16.msra.mxu0 0
    %181 = vmatpush.bf16.msra.mxu0 0
    %182 = vmatpush.bf16.msra.mxu0 0
    %183 = vmatpush.bf16.msra.mxu0 0
    %184 = vmatpush.bf16.msra.mxu0 0
    %185 = vmatpush.bf16.msra.mxu0 0
    %186 = vmatpush.bf16.msra.mxu0 0
    %187 = vmatpush.bf16.msra.mxu0 %v172
    %188 = vmatmul.bf16.gmra.mxu0 %v178
    %v189 = vpop.f32.mrf.mxu0
    %v190 = vadd.f32 %v175, %v189
    %v191 = vpop.f32.mrf.mxu0
    %192 = vdwg.mxu0
    %194 = vrot.lane.b32.xlu0 %v190, 32
    %v195 = vpop.permute.xlu0 %194
    %vm197 = vcmask 910592
    %198 = vst.msk [vmem:[#allocation8 + $0x2] sm:$0x3] %vm197, %v195
    %s199 = scalar_lea.vmem [#allocation5], 24
    %v200 = vld [vmem:[%s199] sm:$0xf]
    %v201 = vld [vmem:[%s199 + $0x4] sm:$0xf]
    %v202 = vld [vmem:[#allocation7 + $0x1] sm:$0x3]
    %v204 = vperm.slane %v202, 0
    %v205 = vperm.slane %v202, 1
    %v206 = vrot.slane %v77, 3
    %v207 = vrot.slane %v78, 2
    %v208 = vsel %vm80, %v207, %v206
    %v209 = vpack.c.b16 %v208, %v208
    %v212 = vunpack.c.l.b16 %v200
    %v213 = vunpack.c.l.b16 %v201
    %v214 = vpack.c.b16 %v213, %v212
    %216 = vrot.lane.b32.xlu0 %v204, 16
    %v217 = vpop.permute.xlu0 %216
    %218 = vrot.lane.b32.xlu0 %v205, 16
    %v219 = vpop.permute.xlu0 %218
    %v220 = vsel %vm89, %v217, %v219
    %v223 = vsel %vm89, %v209, 0
    %225 = vmatpush.bf16.msra.mxu0 0
    %226 = vmatpush.bf16.msra.mxu0 0
    %227 = vmatpush.bf16.msra.mxu0 0
    %228 = vmatpush.bf16.msra.mxu0 0
    %229 = vmatpush.bf16.msra.mxu0 0
    %230 = vmatpush.bf16.msra.mxu0 0
    %231 = vmatpush.bf16.msra.mxu0 0
    %232 = vmatpush.bf16.msra.mxu0 %v214
    %233 = vmatmul.bf16.gmra.mxu0 %v223
    %v234 = vpop.f32.mrf.mxu0
    %v235 = vadd.f32 %v220, %v234
    %v236 = vpop.f32.mrf.mxu0
    %237 = vdwg.mxu0
    %239 = vrot.lane.b32.xlu0 %v235, 112
    %v240 = vpop.permute.xlu0 %239
    %v241 = vrot.slane %v240, 6
    %vm242 = vcmask 916480
    %v243 = vsel %vm242, %v241, %v240
    %vm245 = vcmask 1042304
    %vm246 = vcmask 519170
    %vm247 = vmor %vm246, %vm245
    %248 = vst.msk [vmem:[#allocation8 + $0x2] sm:$0xf] %vm247, %v243
    %s249 = scalar_lea.vmem [#allocation5], 32
    %v250 = vld [vmem:[%s249] sm:$0xf]
    %v251 = vld [vmem:[%s249 + $0x4] sm:$0xf]
    %v252 = vld [vmem:[#allocation7 + $0x2] sm:$0x3]
    %v254 = vperm.slane %v252, 0
    %v255 = vperm.slane %v252, 1
    %v256 = vrot.slane %v77, 4
    %v257 = vrot.slane %v78, 3
    %v258 = vsel %vm80, %v257, %v256
    %v259 = vpack.c.b16 %v258, %v258
    %v262 = vunpack.c.l.b16 %v250
    %v263 = vunpack.c.l.b16 %v251
    %v264 = vpack.c.b16 %v263, %v262
    %266 = vrot.lane.b32.xlu0 %v254, 64
    %v267 = vpop.permute.xlu0 %266
    %268 = vrot.lane.b32.xlu0 %v255, 64
    %v269 = vpop.permute.xlu0 %268
    %vm270 = vcmask 523264
    %v271 = vsel %vm270, %v267, %v269
    %v274 = vsel %vm89, %v259, 0
    %276 = vmatpush.bf16.msra.mxu0 0
    %277 = vmatpush.bf16.msra.mxu0 0
    %278 = vmatpush.bf16.msra.mxu0 0
    %279 = vmatpush.bf16.msra.mxu0 0
    %280 = vmatpush.bf16.msra.mxu0 0
    %281 = vmatpush.bf16.msra.mxu0 0
    %282 = vmatpush.bf16.msra.mxu0 0
    %283 = vmatpush.bf16.msra.mxu0 %v264
    %284 = vmatmul.bf16.gmra.mxu0 %v274
    %v285 = vpop.f32.mrf.mxu0
    %v286 = vadd.f32 %v271, %v285
    %v287 = vpop.f32.mrf.mxu0
    %288 = vdwg.mxu0
    %290 = vrot.lane.b32.xlu0 %v286, 64
    %v291 = vpop.permute.xlu0 %290
    %v292 = vrot.slane %v291, 6
    %v293 = vsel %vm270, %v292, %v291
    %vm295 = vcmask 1041920
    %vm296 = vcmask 125954
    %vm297 = vmor %vm296, %vm295
    %298 = vst.msk [vmem:[#allocation8 + $0x4] sm:$0xf] %vm297, %v293
    %s299 = scalar_lea.vmem [#allocation5], 40
    %v300 = vld [vmem:[%s299] sm:$0xf]
    %v301 = vld [vmem:[%s299 + $0x4] sm:$0xf]
    %v302 = vld [vmem:[#allocation7 + $0x3] sm:$0x1]
    %v304 = vperm.slane %v302, 0
    %v305 = vrot.slane %v77, 5
    %v306 = vrot.slane %v78, 4
    %v307 = vsel %vm80, %v306, %v305
    %v308 = vpack.c.b16 %v307, %v307
    %v311 = vunpack.c.l.b16 %v300
    %v312 = vunpack.c.l.b16 %v301
    %v313 = vpack.c.b16 %v312, %v311
    %315 = vrot.lane.b32.xlu0 %v304, 112
    %v316 = vpop.permute.xlu0 %315
    %v319 = vsel %vm89, %v308, 0
    %321 = vmatpush.bf16.msra.mxu0 0
    %322 = vmatpush.bf16.msra.mxu0 0
    %323 = vmatpush.bf16.msra.mxu0 0
    %324 = vmatpush.bf16.msra.mxu0 0
    %325 = vmatpush.bf16.msra.mxu0 0
    %326 = vmatpush.bf16.msra.mxu0 0
    %327 = vmatpush.bf16.msra.mxu0 0
    %328 = vmatpush.bf16.msra.mxu0 %v313
    %329 = vmatmul.bf16.gmra.mxu0 %v319
    %v330 = vpop.f32.mrf.mxu0
    %v331 = vadd.f32 %v316, %v330
    %v332 = vpop.f32.mrf.mxu0
    %333 = vdwg.mxu0
    %335 = vrot.lane.b32.xlu0 %v331, 16
    %v336 = vpop.permute.xlu0 %335
    %vm338 = vcmask 779392
    %339 = vst.msk [vmem:[#allocation8 + $0x6] sm:$0x3] %vm338, %v336
    %s340 = scalar_lea.vmem [#allocation5], 48
    %v341 = vld [vmem:[%s340] sm:$0xf]
    %v342 = vld [vmem:[%s340 + $0x4] sm:$0xf]
    %v343 = vld [vmem:[#allocation7 + $0x3] sm:$0x3]
    %v345 = vperm.slane %v343, 0
    %v346 = vperm.slane %v343, 1
    %v347 = vrot.slane %v77, 6
    %v348 = vrot.slane %v78, 5
    %v349 = vsel %vm80, %v348, %v347
    %v350 = vpack.c.b16 %v349, %v349
    %v353 = vunpack.c.l.b16 %v341
    %v354 = vunpack.c.l.b16 %v342
    %v355 = vpack.c.b16 %v354, %v353
    %357 = vrot.lane.b32.xlu0 %v345, 32
    %v358 = vpop.permute.xlu0 %357
    %359 = vrot.lane.b32.xlu0 %v346, 32
    %v360 = vpop.permute.xlu0 %359
    %vm361 = vcmask 261120
    %v362 = vsel %vm361, %v358, %v360
    %v365 = vsel %vm89, %v350, 0
    %367 = vmatpush.bf16.msra.mxu0 0
    %368 = vmatpush.bf16.msra.mxu0 0
    %369 = vmatpush.bf16.msra.mxu0 0
    %370 = vmatpush.bf16.msra.mxu0 0
    %371 = vmatpush.bf16.msra.mxu0 0
    %372 = vmatpush.bf16.msra.mxu0 0
    %373 = vmatpush.bf16.msra.mxu0 0
    %374 = vmatpush.bf16.msra.mxu0 %v355
    %375 = vmatmul.bf16.gmra.mxu0 %v365
    %v376 = vpop.f32.mrf.mxu0
    %v377 = vadd.f32 %v362, %v376
    %v378 = vpop.f32.mrf.mxu0
    %379 = vdwg.mxu0
    %381 = vrot.lane.b32.xlu0 %v377, 96
    %v382 = vpop.permute.xlu0 %381
    %v383 = vrot.slane %v382, 6
    %vm384 = vcmask 785408
    %v385 = vsel %vm384, %v383, %v382
    %vm387 = vcmask 1042176
    %vm388 = vcmask 388098
    %vm389 = vmor %vm388, %vm387
    %390 = vst.msk [vmem:[#allocation8 + $0x6] sm:$0xf] %vm389, %v385
    %s391 = scalar_lea.vmem [#allocation5], 56
    %v392 = vld [vmem:[%s391] sm:$0xf]
    %v393 = vld [vmem:[%s391 + $0x4] sm:$0xf]
    %v394 = vld [vmem:[#allocation7 + $0x4] sm:$0x1]
    %v396 = vperm.slane %v394, 0
    %v397 = vrot.slane %v77, 7
    %v398 = vrot.slane %v78, 6
    %v399 = vsel %vm80, %v398, %v397
    %v400 = vpack.c.b16 %v399, %v399
    %v403 = vunpack.c.l.b16 %v392
    %v404 = vunpack.c.l.b16 %v393
    %v405 = vpack.c.b16 %v404, %v403
    %407 = vrot.lane.b32.xlu0 %v396, 80
    %v408 = vpop.permute.xlu0 %407
    %v411 = vsel %vm89, %v400, 0
    %413 = vmatpush.bf16.msra.mxu0 0
    %414 = vmatpush.bf16.msra.mxu0 0
    %415 = vmatpush.bf16.msra.mxu0 0
    %416 = vmatpush.bf16.msra.mxu0 0
    %417 = vmatpush.bf16.msra.mxu0 0
    %418 = vmatpush.bf16.msra.mxu0 0
    %419 = vmatpush.bf16.msra.mxu0 0
    %420 = vmatpush.bf16.msra.mxu0 %v405
    %421 = vmatmul.bf16.gmra.mxu0 %v411
    %v422 = vpop.f32.mrf.mxu0
    %v423 = vadd.f32 %v408, %v422
    %v424 = vpop.f32.mrf.mxu0
    %425 = vdwg.mxu0
    %427 = vrot.lane.b32.xlu0 %v423, 48
    %v428 = vpop.permute.xlu0 %427
    %vm430 = vcmask 1041792
    %431 = vst.msk [vmem:[#allocation8 + $0x8] sm:$0x3] %vm430, %v428
    // Predicated region
    $region26: #{tpu_custom_call.1} parent=1 // pred_check
      _
    $region27: #{tpu_custom_call.1} parent=1 // pred_check_branch
      %433 = sbr.rel (0) target = $region29
    $region28: #{tpu_custom_call.1} parent=1 // pred_region
      %435 = vsyncadd [#allocation4], 0
      %s437 = sshll.u32 [#allocation8], 4
      %s438 = int_to_ptr.vmem [resolvable:$true] %s437
      %s439 = sshll.u32 %s3, 4
      %s440 = int_to_ptr.hbm [resolvable:$true] %s439
      %442 = dma.vmem_to_hbm [thread:$0]  %s438, 160, %s440, [#allocation4]
    $region29: #{tpu_custom_call.1} parent=1 // pred_fallthru
      _
    // Predicated region
    $region30: #{tpu_custom_call.1} parent=1 // pred_check
      _
    $region31: #{tpu_custom_call.1} parent=1 // pred_check_branch
      %444 = sbr.rel (0) target = $region33
    $region32: #{tpu_custom_call.1} parent=1 // pred_region
      %446 = dma.done [#allocation4], 160
    $region33: #{tpu_custom_call.1} parent=1 // pred_fallthru
      _
    %447 = vsyncpa [#allocation3], 1
    %448 = vsyncpa [#allocation6], 1
    %449 = vsyncpa [#allocation4], 1

</llo_original>
